<compile_context>
chip_gen: v7x
topology: tpu7x:2x2x1
jax: 0.10.0
libtpu: 0.0.40
codegen_flags: <defaults>
</compile_context>

<pallas_src>
import jax
import jax.numpy as jnp
from jax.experimental import pallas as pl
from jax.experimental.pallas import tpu as pltpu

_LANE = 128
_SUBLANE = 8
_TM_MAX = 256                        # batch-tile cap (rows per grid step)
_TK_CAP = 4096                       # K-tile cap (perf review: 2048-4096)
_STREAM_BUDGET = 32 * 1024 * 1024    # VMEM for double-buffered x / W_bb streams
_VMEM_LIMIT = 48 * 1024 * 1024       # v7x-aware scoped VMEM (64 MiB/TC physical)


def _round_up(x: int, m: int) -> int:
    return (x + m - 1) // m * m


def _pad2d(a, rows: int, cols: int):
    if a.shape == (rows, cols):
        return a
    return jnp.pad(a, ((0, rows - a.shape[0]), (0, cols - a.shape[1])))


def _choose_tm(n: int) -> int:
    """Batch tile: large enough to amortize per-grid-step overhead, 16-row
    aligned (bf16-friendly), and yielding >=2 batch blocks when the batch
    allows it so the "parallel" axis really spans both TensorCores on v7x."""
    if n <= _SUBLANE:
        return _SUBLANE
    if n <= 32:
        return _round_up(n, 16)
    return min(_TM_MAX, _round_up((n + 1) // 2, 16))


def _choose_k_tiling(k: int, e_pad: int):
    """Pick (k_pad, tk).  Use the whole K as a single block when the
    double-buffered x (f32) + W_bb (bf16) streams fit the VMEM budget,
    otherwise the largest 128-multiple divisor of k_pad under the cap (so the
    K reduction never accumulates out-of-bounds garbage)."""
    per_k = 2 * _TM_MAX * 4 + 2 * e_pad * 2           # VMEM bytes per K column
    cap = min(_TK_CAP, max(_LANE, (_STREAM_BUDGET // per_k) // _LANE * _LANE))
    if k <= cap:
        return k, k                                    # one K step, no padding
    k_pad = _round_up(k, _LANE)
    m = k_pad // _LANE
    best, d = 1, 1
    while d * d <= m:
        if m % d == 0:
            for c in (d, m // d):
                if c * _LANE <= cap:
                    best = max(best, c)
        d += 1
    return k_pad, best * _LANE


# ---------------------------------------------------------------------------
# Kernel bodies
# ---------------------------------------------------------------------------
def _probe_logits_kernel(x_ref, wbb_ref, bbb_ref, wfc_ref, bfc_ref,
                         logits_ref, acc_ref):
    k = pl.program_id(1)

    @pl.when(k == 0)
    def _():
        acc_ref[...] = jnp.zeros_like(acc_ref)

    # Backbone partial matmul: in-kernel bf16 cast of the f32 activation tile,
    # bf16 MXU matmul with f32 accumulation.
    acc_ref[...] += jnp.dot(x_ref[...].astype(jnp.bfloat16), wbb_ref[...],
                            preferred_element_type=jnp.float32)

    @pl.when(k == pl.num_programs(1) - 1)
    def _():
        # Bias + ReLU only in the finalize step (not once per K iteration).
        feats = jnp.maximum(acc_ref[...] + bbb_ref[...], 0.0)
        # Head fused in the same kernel: bf16 operands, f32 accumulation,
        # lane-dense (c_pad = multiple of 128) output store.
        logits = jnp.dot(feats.astype(jnp.bfloat16), wfc_ref[...],
                         preferred_element_type=jnp.float32)
        logits_ref[...] = (logits + bfc_ref[...]).astype(logits_ref.dtype)


def _probe_features_kernel(x_ref, wbb_ref, bbb_ref, feat_ref, acc_ref):
    k = pl.program_id(1)

    @pl.when(k == 0)
    def _():
        acc_ref[...] = jnp.zeros_like(acc_ref)

    acc_ref[...] += jnp.dot(x_ref[...].astype(jnp.bfloat16), wbb_ref[...],
                            preferred_element_type=jnp.float32)

    @pl.when(k == pl.num_programs(1) - 1)
    def _():
        feats = jnp.maximum(acc_ref[...] + bbb_ref[...], 0.0)
        feat_ref[...] = feats.astype(feat_ref.dtype)     # bf16 writeback


# ---------------------------------------------------------------------------
# pallas_call builders
# ---------------------------------------------------------------------------
def probe_logits(x2d, w_bb_p, b_bb_p, w_fc_p, b_fc_p, *, tm, tk):
    n, k_pad = x2d.shape
    e_pad = w_bb_p.shape[1]
    c_pad = w_fc_p.shape[1]
    grid = (pl.cdiv(n, tm), k_pad // tk)

    cost = pl.CostEstimate(
        flops=2 * n * k_pad * e_pad + 2 * n * e_pad * c_pad,
        transcendentals=0,
        bytes_accessed=(x2d.size * 4 + w_bb_p.size * 2 + b_bb_p.size * 4
                        + w_fc_p.size * 2 + b_fc_p.size * 4 + n * c_pad * 4))

    return pl.pallas_call(
        _probe_logits_kernel,
        out_shape=jax.ShapeDtypeStruct((n, c_pad), jnp.float32),
        grid_spec=pltpu.PrefetchScalarGridSpec(
            num_scalar_prefetch=0,
            grid=grid,
            in_specs=[
                pl.BlockSpec((tm, tk), lambda i, k: (i, k)),        # x (f32)
                pl.BlockSpec((tk, e_pad), lambda i, k: (k, 0)),     # W_bb (bf16)
                pl.BlockSpec((1, e_pad), lambda i, k: (0, 0)),      # b_bb
                pl.BlockSpec((e_pad, c_pad), lambda i, k: (0, 0)),  # W_fc (bf16)
                pl.BlockSpec((1, c_pad), lambda i, k: (0, 0)),      # b_fc
            ],
            out_specs=pl.BlockSpec((tm, c_pad), lambda i, k: (i, 0)),
            scratch_shapes=[pltpu.VMEM((tm, e_pad), jnp.float32)],  # f32 acc
        ),
        compiler_params=pltpu.CompilerParams(
            dimension_semantics=("parallel", "arbitrary"),
            vmem_limit_bytes=_VMEM_LIMIT),
        cost_estimate=cost,
    )(x2d, w_bb_p, b_bb_p, w_fc_p, b_fc_p)


def probe_features(x2d, w_bb_p, b_bb_p, *, tm, tk):
    n, k_pad = x2d.shape
    e_pad = w_bb_p.shape[1]
    grid = (pl.cdiv(n, tm), k_pad // tk)

    cost = pl.CostEstimate(
        flops=2 * n * k_pad * e_pad,
        transcendentals=0,
        bytes_accessed=(x2d.size * 4 + w_bb_p.size * 2 + b_bb_p.size * 4
                        + n * e_pad * 2))

    return pl.pallas_call(
        _probe_features_kernel,
        out_shape=jax.ShapeDtypeStruct((n, e_pad), jnp.bfloat16),
        grid_spec=pltpu.PrefetchScalarGridSpec(
            num_scalar_prefetch=0,
            grid=grid,
            in_specs=[
                pl.BlockSpec((tm, tk), lambda i, k: (i, k)),
                pl.BlockSpec((tk, e_pad), lambda i, k: (k, 0)),
                pl.BlockSpec((1, e_pad), lambda i, k: (0, 0)),
            ],
            out_specs=pl.BlockSpec((tm, e_pad), lambda i, k: (i, 0)),
            scratch_shapes=[pltpu.VMEM((tm, e_pad), jnp.float32)],
        ),
        compiler_params=pltpu.CompilerParams(
            dimension_semantics=("parallel", "arbitrary"),
            vmem_limit_bytes=_VMEM_LIMIT),
        cost_estimate=cost,
    )(x2d, w_bb_p, b_bb_p)


# ---------------------------------------------------------------------------
# GenericModelProbe equivalent
# ---------------------------------------------------------------------------
class GenericModelProbePallas:
    """Frozen synthetic backbone (flatten -> Linear -> ReLU) + trainable head."""

    def __init__(self, in_dim, embedding_size, num_classes=1, *, key):
        k1, k2, k3, k4 = jax.random.split(key, 4)

        # ---- logical (unpadded) parameters ---------------------------------
        # Frozen backbone: bf16 weights (frozen / no-grad, MXU friendly).
        self.w_bb = (jax.random.normal(k1, (in_dim, embedding_size), jnp.float32)
                     / jnp.sqrt(jnp.float32(in_dim))).astype(jnp.bfloat16)
        self.b_bb = jax.random.normal(k2, (1, embedding_size), jnp.float32) * 0.01
        # Trainable head Linear(E, C), PyTorch-style uniform init, stored (E, C).
        bound = 1.0 / jnp.sqrt(jnp.float32(embedding_size))
        self.w_fc = jax.random.uniform(k3, (embedding_size, num_classes),
                                       jnp.float32, -bound, bound)
        self.b_fc = jax.random.uniform(k4, (1, num_classes),
                                       jnp.float32, -bound, bound)

        self.in_dim = in_dim
        self.embedding_size = embedding_size
        self.num_classes = num_classes

        # ---- padded, lane-dense kernel operands (built once at init) -------
        self.e_pad = _round_up(embedding_size, _LANE)
        self.c_pad = _round_up(num_classes, _LANE)
        self.k_pad, self.tk = _choose_k_tiling(in_dim, self.e_pad)

        self._w_bb_p = _pad2d(self.w_bb, self.k_pad, self.e_pad)               # bf16
        self._b_bb_p = _pad2d(self.b_bb, 1, self.e_pad)                        # f32
        self._w_fc_p = _pad2d(self.w_fc, self.e_pad, self.c_pad).astype(jnp.bfloat16)
        self._b_fc_p = _pad2d(self.b_fc, 1, self.c_pad)                        # f32

        # jit the thin wrappers so the flatten / (rare) K-pad / column slice
        # fuse around the pallas_call instead of extra eager passes over x.
        self._logits_fn = jax.jit(self._logits_impl)
        self._features_fn = jax.jit(self._features_impl)

    # -- helpers --------------------------------------------------------------
    def _prep_x(self, x_nchw):
        n = x_nchw.shape[0]
        x2d = x_nchw.reshape(n, -1)                 # stays f32; bf16 cast in-kernel
        if self.k_pad != self.in_dim:               # only for huge, non-128 K
            x2d = jnp.pad(x2d, ((0, 0), (0, self.k_pad - self.in_dim)))
        return x2d, _choose_tm(n)

    def _logits_impl(self, x_nchw):
        x2d, tm = self._prep_x(x_nchw)
        logits_p = probe_logits(x2d, self._w_bb_p, self._b_bb_p,
                                self._w_fc_p, self._b_fc_p, tm=tm, tk=self.tk)
        return logits_p[:, :self.num_classes]

    def _features_impl(self, x_nchw):
        x2d, tm = self._prep_x(x_nchw)
        feats_p = probe_features(x2d, self._w_bb_p, self._b_bb_p,
                                 tm=tm, tk=self.tk)
        # Frozen backbone: mirror torch.no_grad() on the feature path.
        # TODO(synk): training the head through the fused logits kernel would
        # need a custom_vjp; this implements the forward pass only.
        return jax.lax.stop_gradient(feats_p[:, :self.embedding_size])

    # -- public API (mirrors the PyTorch module) ------------------------------
    def forward_features(self, x_nchw):
        return self._features_fn(x_nchw)

    def forward_head(self, features):
        return features.astype(jnp.float32) @ self.w_fc + self.b_fc

    def __call__(self, x_nchw, return_embedding=False):
        if return_embedding:
            return self._features_fn(x_nchw)
        return self._logits_fn(x_nchw)


# ---------------------------------------------------------------------------
# Main
# ---------------------------------------------------------------------------
if __name__ == "__main__":
    key = jax.random.PRNGKey(0)
    k_x, k_p = jax.random.split(key)

    N, C, H, W = 2, 4, 16, 16            # NCHW input
    EMBED, NUM_CLASSES = 32, 1           # embedding_size, num_classes (default 1)

    x = jax.random.normal(k_x, (N, C, H, W), jnp.float32)
    model = GenericModelProbePallas(C * H * W, EMBED, NUM_CLASSES, key=k_p)

    # logits path (no feature writeback)
    logits = jax.block_until_ready(model(x))
    assert logits.shape == (N, NUM_CLASSES), logits.shape

    # embedding path (backbone only, bf16 features)
    feats = jax.block_until_ready(model(x, return_embedding=True))
    assert feats.shape == (N, EMBED), feats.shape
    assert feats.dtype == jnp.bfloat16

    # Reference in plain JAX, mirroring the kernel numerics:
    #   backbone: bf16 operands, f32 accumulation; features stored bf16
    #   head:     bf16 operands, f32 accumulation, f32 bias
    x_flat_bf16 = x.reshape(N, -1).astype(jnp.bfloat16)
    ref_feats_f32 = jnp.maximum(
        jnp.dot(x_flat_bf16, model.w_bb, preferred_element_type=jnp.float32)
        + model.b_bb, 0.0)
    ref_feats = ref_feats_f32.astype(jnp.bfloat16)
    ref_logits = (jnp.dot(ref_feats_f32.astype(jnp.bfloat16),
                          model.w_fc.astype(jnp.bfloat16),
                          preferred_element_type=jnp.float32) + model.b_fc)

    assert jnp.allclose(feats.astype(jnp.float32), ref_feats.astype(jnp.float32),
                        atol=2e-2, rtol=2e-2)
    assert jnp.allclose(logits, ref_logits, atol=2e-2, rtol=2e-2)

    print("KERNEL_OK")
</pallas_src>

<mosaic_0001>
module attributes {stable_mosaic.version = 11 : i64} {
  func.func @_probe_logits_kernel(%arg0: i32, %arg1: i32, %arg2: memref<8x1024xf32, #tpu.memory_space<vmem>>, %arg3: memref<1024x128xbf16, #tpu.memory_space<vmem>>, %arg4: memref<1x128xf32, #tpu.memory_space<vmem>>, %arg5: memref<128x128xbf16, #tpu.memory_space<vmem>>, %arg6: memref<1x128xf32, #tpu.memory_space<vmem>>, %arg7: memref<8x128xf32, #tpu.memory_space<vmem>>, %arg8: memref<8x128xf32, #tpu.memory_space<vmem>>) attributes {dimension_semantics = [#tpu.dimension_semantics<parallel>, #tpu.dimension_semantics<arbitrary>], iteration_bounds = array<i64: 1, 1>, scalar_prefetch = 0 : i64, scratch_operands = 1 : i64, tpu.core_type = #tpu.core_type<tc>, window_params = [{transform_indices = @transform_0, window_bounds = array<i64: 8, 1024>}, {transform_indices = @transform_1, window_bounds = array<i64: 1024, 128>}, {pipeline_mode = #tpu.pipeline_mode<synchronous>, transform_indices = @transform_2, window_bounds = array<i64: 1, 128>}, {pipeline_mode = #tpu.pipeline_mode<synchronous>, transform_indices = @transform_3, window_bounds = array<i64: 128, 128>}, {pipeline_mode = #tpu.pipeline_mode<synchronous>, transform_indices = @transform_4, window_bounds = array<i64: 1, 128>}, {transform_indices = @transform_5, window_bounds = array<i64: 8, 128>}]} {
    %c0_i32 = arith.constant 0 : i32
    %0 = arith.cmpi eq, %arg1, %c0_i32 : i32
    %1 = arith.extui %0 : i1 to i32
    %c0_i32_0 = arith.constant 0 : i32
    %2 = arith.cmpi ne, %1, %c0_i32_0 : i32
    scf.if %2 {
      %cst_10 = arith.constant 0.000000e+00 : f32
      %13 = vector.broadcast %cst_10 : f32 to vector<8x128xf32>
      %c0_11 = arith.constant 0 : index
      %c0_12 = arith.constant 0 : index
      %14 = vector.load %arg8[%c0_11, %c0_12] : memref<8x128xf32, #tpu.memory_space<vmem>>, vector<8x128xf32>
      tpu.vector_store %arg8[%c0_11, %c0_12], %13 {strides = array<i32>} : memref<8x128xf32, #tpu.memory_space<vmem>>, vector<8x128xf32>,
    } else {
    }
    %c0 = arith.constant 0 : index
    %c0_1 = arith.constant 0 : index
    %3 = vector.load %arg8[%c0, %c0_1] : memref<8x128xf32, #tpu.memory_space<vmem>>, vector<8x128xf32>
    %c0_2 = arith.constant 0 : index
    %c0_3 = arith.constant 0 : index
    %4 = vector.load %arg2[%c0_2, %c0_3] : memref<8x1024xf32, #tpu.memory_space<vmem>>, vector<8x1024xf32>
    %5 = arith.truncf %4 : vector<8x1024xf32> to vector<8x1024xbf16>
    %c0_4 = arith.constant 0 : index
    %c0_5 = arith.constant 0 : index
    %6 = vector.load %arg3[%c0_4, %c0_5] : memref<1024x128xbf16, #tpu.memory_space<vmem>>, vector<1024x128xbf16>
    %cst = arith.constant dense<0.000000e+00> : vector<8x128xf32>
    %7 = tpu.matmul %5, %6, %cst {dimension_numbers = #tpu.dot_dimension_numbers<[1], [0], [0], [1], [0, 0, 1, 1], [], []>} : vector<8x1024xbf16>, vector<1024x128xbf16>, vector<8x128xf32> -> vector<8x128xf32>
    %8 = arith.addf %3, %7 : vector<8x128xf32>
    %c0_6 = arith.constant 0 : index
    %c0_7 = arith.constant 0 : index
    %9 = vector.load %arg8[%c0_6, %c0_7] : memref<8x128xf32, #tpu.memory_space<vmem>>, vector<8x128xf32>
    tpu.vector_store %arg8[%c0_6, %c0_7], %8 {strides = array<i32>} : memref<8x128xf32, #tpu.memory_space<vmem>>, vector<8x128xf32>,
    %c0_i32_8 = arith.constant 0 : i32
    %10 = arith.cmpi eq, %arg1, %c0_i32_8 : i32
    %11 = arith.extui %10 : i1 to i32
    %c0_i32_9 = arith.constant 0 : i32
    %12 = arith.cmpi ne, %11, %c0_i32_9 : i32
    scf.if %12 {
      %c0_10 = arith.constant 0 : index
      %c0_11 = arith.constant 0 : index
      %13 = vector.load %arg8[%c0_10, %c0_11] : memref<8x128xf32, #tpu.memory_space<vmem>>, vector<8x128xf32>
      %c0_12 = arith.constant 0 : index
      %c0_13 = arith.constant 0 : index
      %14 = vector.load %arg4[%c0_12, %c0_13] : memref<1x128xf32, #tpu.memory_space<vmem>>, vector<1x128xf32>
      %15 = vector.broadcast %14 : vector<1x128xf32> to vector<8x128xf32>
      %16 = arith.addf %13, %15 : vector<8x128xf32>
      %cst_14 = arith.constant 0.000000e+00 : f32
      %17 = vector.broadcast %cst_14 : f32 to vector<8x128xf32>
      %18 = arith.maximumf %16, %17 : vector<8x128xf32>
      %19 = arith.truncf %18 : vector<8x128xf32> to vector<8x128xbf16>
      %c0_15 = arith.constant 0 : index
      %c0_16 = arith.constant 0 : index
      %20 = vector.load %arg5[%c0_15, %c0_16] : memref<128x128xbf16, #tpu.memory_space<vmem>>, vector<128x128xbf16>
      %cst_17 = arith.constant dense<0.000000e+00> : vector<8x128xf32>
      %21 = tpu.matmul %19, %20, %cst_17 {dimension_numbers = #tpu.dot_dimension_numbers<[1], [0], [0], [1], [0, 0, 1, 1], [], []>} : vector<8x128xbf16>, vector<128x128xbf16>, vector<8x128xf32> -> vector<8x128xf32>
      %c0_18 = arith.constant 0 : index
      %c0_19 = arith.constant 0 : index
      %22 = vector.load %arg6[%c0_18, %c0_19] : memref<1x128xf32, #tpu.memory_space<vmem>>, vector<1x128xf32>
      %23 = vector.broadcast %22 : vector<1x128xf32> to vector<8x128xf32>
      %24 = arith.addf %21, %23 : vector<8x128xf32>
      %c0_20 = arith.constant 0 : index
      %c0_21 = arith.constant 0 : index
      %25 = vector.load %arg7[%c0_20, %c0_21] : memref<8x128xf32, #tpu.memory_space<vmem>>, vector<8x128xf32>
      tpu.vector_store %arg7[%c0_20, %c0_21], %24 {strides = array<i32>} : memref<8x128xf32, #tpu.memory_space<vmem>>, vector<8x128xf32>,
    } else {
    }
    return
  }
  func.func @transform_0(%arg0: i32, %arg1: i32) -> (i32, i32) {
    %c0_i32 = arith.constant 0 : i32
    return %arg0, %arg1 : i32, i32
  }
  func.func @transform_1(%arg0: i32, %arg1: i32) -> (i32, i32) {
    %c0_i32 = arith.constant 0 : i32
    %c0_i32_0 = arith.constant 0 : i32
    return %arg1, %c0_i32 : i32, i32
  }
  func.func @transform_2(%arg0: i32, %arg1: i32) -> (i32, i32) {
    %c0_i32 = arith.constant 0 : i32
    %c0_i32_0 = arith.constant 0 : i32
    %c0_i32_1 = arith.constant 0 : i32
    return %c0_i32, %c0_i32_0 : i32, i32
  }
  func.func @transform_3(%arg0: i32, %arg1: i32) -> (i32, i32) {
    %c0_i32 = arith.constant 0 : i32
    %c0_i32_0 = arith.constant 0 : i32
    %c0_i32_1 = arith.constant 0 : i32
    return %c0_i32, %c0_i32_0 : i32, i32
  }
  func.func @transform_4(%arg0: i32, %arg1: i32) -> (i32, i32) {
    %c0_i32 = arith.constant 0 : i32
    %c0_i32_0 = arith.constant 0 : i32
    %c0_i32_1 = arith.constant 0 : i32
    return %c0_i32, %c0_i32_0 : i32, i32
  }
  func.func @transform_5(%arg0: i32, %arg1: i32) -> (i32, i32) {
    %c0_i32 = arith.constant 0 : i32
    %c0_i32_0 = arith.constant 0 : i32
    return %arg0, %c0_i32 : i32, i32
  }
}

</mosaic_0001>

<llo_original>
// kernel: _logits_impl.1
$region0: #{_logits_impl.1}
  #allocation0 [shape = 'u32[]', space=smem, size = 0x4, offset = 0x4, fixed_abs, tag = 'smem constant byte address 0x4 - core index']
  #allocation1 [shape = 'u32[144,128]{1,0:T(1,128)}', space=vmem, size = 0x12000, scoped, tag = 'internal scratch']
  #allocation2 [shape = 'f32[8,128]{1,0:T(8,128)}', space=vmem, size = 0x1000, scoped, tag = 'scratch operand']
  %s0 = inlined_call_operand.vmem [shape: f32[2,1024], index: 0, kind: input, shape index: {}]
  %s1 = inlined_call_operand.hbm [shape: bf16[1024,128], index: 1, kind: input, shape index: {}]
  %s2 = inlined_call_operand.vmem [shape: f32[1,128], index: 2, kind: input, shape index: {}]
  %s3 = inlined_call_operand.vmem [shape: bf16[128,128], index: 3, kind: input, shape index: {}]
  %s4 = inlined_call_operand.vmem [shape: f32[1,128], index: 4, kind: input, shape index: {}]
  %s5 = inlined_call_operand.vmem [shape: f32[2,128], index: 5, kind: output, shape index: {}]
  %s6 = sld [smem:[#allocation0]]
  $region72: #{_logits_impl.1} parent=0
    _
  %s8 = ssub.s32 1, %s6
  %s9 = scalar_select 0, %s8, %s6
  $region1: #{_logits_impl.1} parent=0
    #allocation3 [shape = 'u8[262144]{0}', space=vmem, size = 0x40000, scoped, tag = 'input window, operand 1, single buffered']
    #allocation4 [shape = 's32[1]{0}', space=sflag, size = 0x4, scoped, tag = 'scoped memory for _logits_impl.1']
    #allocation5 [shape = 'u8[4096]{0}', space=vmem, size = 0x1000, scoped, tag = 'output window, operand 0, single buffered']
    %10 = vsyncpa [#allocation4], 0
    // Predicated region
    $region2: #{_logits_impl.1} parent=1 // pred_check
      _
    $region3: #{_logits_impl.1} parent=1 // pred_check_branch
      %12 = sbr.rel (0) target = $region5
    $region4: #{_logits_impl.1} parent=1 // pred_region
      _
    $region5: #{_logits_impl.1} parent=1 // pred_fallthru
      _
    // Predicated region
    $region6: #{_logits_impl.1} parent=1 // pred_check
      _
    $region7: #{_logits_impl.1} parent=1 // pred_check_branch
      %14 = sbr.rel (0) target = $region9
    $region8: #{_logits_impl.1} parent=1 // pred_region
      %s16 = ssub.s32 8192, 8192
      %17 = vsyncadd [#allocation4], %s16
      %s18 = sshll.u32 [#allocation3], 4
      %s19 = int_to_ptr.vmem [resolvable:$true] %s18
      %24 = dma.hbm_to_vmem [thread:$0]  %s1, 8192, %s19, [#allocation4], 64, 64, 4
    $region9: #{_logits_impl.1} parent=1 // pred_fallthru
      _
    // Predicated region
    $region10: #{_logits_impl.1} parent=1 // pred_check
      _
    $region11: #{_logits_impl.1} parent=1 // pred_check_branch
      %26 = sbr.rel (0) target = $region13
    $region12: #{_logits_impl.1} parent=1 // pred_region
      _
    $region13: #{_logits_impl.1} parent=1 // pred_fallthru
      _
    // Predicated region
    $region14: #{_logits_impl.1} parent=1 // pred_check
      _
    $region15: #{_logits_impl.1} parent=1 // pred_check_branch
      %28 = sbr.rel (0) target = $region17
    $region16: #{_logits_impl.1} parent=1 // pred_region
      _
    $region17: #{_logits_impl.1} parent=1 // pred_fallthru
      _
    // Predicated region
    $region18: #{_logits_impl.1} parent=1 // pred_check
      _
    $region19: #{_logits_impl.1} parent=1 // pred_check_branch
      %30 = sbr.rel (0) target = $region21
    $region20: #{_logits_impl.1} parent=1 // pred_region
      _
    $region21: #{_logits_impl.1} parent=1 // pred_fallthru
      _
    // Predicated region
    $region22: #{_logits_impl.1} parent=1 // pred_check
      _
    $region23: #{_logits_impl.1} parent=1 // pred_check_branch
      %32 = sbr.rel (0) target = $region25
    $region24: #{_logits_impl.1} parent=1 // pred_region
      %33 = dma.done [#allocation4], 8192
    $region25: #{_logits_impl.1} parent=1 // pred_fallthru
      _
    %p35 = scmp.eq.s32.totalorder 0, 0
    // Predicated region
    $region26: #{_logits_impl.1} parent=1 // pred_check
      %p36 = pneg %p35
    $region27: #{_logits_impl.1} parent=1 // pred_check_branch
      %38 = sbr.rel (%p36) target = $region29
    $region28: #{_logits_impl.1} parent=1 // pred_region
      %39 = vst [vmem:[#allocation2] sm:$0xff] 0.0
    $region29: #{_logits_impl.1} parent=1 // pred_fallthru
      _
    %v40 = vld [vmem:[#allocation2] sm:$0xff]
    %v41 = vld [vmem:[%s0] sm:$0xff]
    %v42 = vld [vmem:[%s0 + $0x8] sm:$0xff]
    %v43 = vld [vmem:[%s0 + $0x10] sm:$0xff]
    %v44 = vld [vmem:[%s0 + $0x18] sm:$0xff]
    %v45 = vld [vmem:[%s0 + $0x20] sm:$0xff]
    %v46 = vld [vmem:[%s0 + $0x28] sm:$0xff]
    %v47 = vld [vmem:[%s0 + $0x30] sm:$0xff]
    %v48 = vld [vmem:[%s0 + $0x38] sm:$0xff]
    %v57 = vcombine.low %v41, %v43
    %v58 = vcombine.high %v41, %v43
    %v59 = vcombine.low %v45, %v47
    %v60 = vcombine.high %v45, %v47
    %v62 = vunpack.c.l.s4 1983009808
    %v63 = vunpack.c.0.s8 %v62
    %v64 = vlaneseq
    %v65 = vshrl.u32 %v64, 7
    %v66 = vsub.s32 %v63, %v65
    %v67 = vrot.slane %v57, %v66
    %v69 = vunpack.c.l.s4 1983009808
    %v70 = vunpack.c.0.s8 %v69
    %v71 = vlaneseq
    %v72 = vshrl.u32 %v71, 7
    %v73 = vsub.s32 %v70, %v72
    %v74 = vrot.slane %v58, %v73
    %v76 = vunpack.c.l.s4 1983009808
    %v77 = vunpack.c.0.s8 %v76
    %v78 = vlaneseq
    %v79 = vshrl.u32 %v78, 7
    %v80 = vsub.s32 %v77, %v79
    %v81 = vrot.slane %v59, %v80
    %v83 = vunpack.c.l.s4 1983009808
    %v84 = vunpack.c.0.s8 %v83
    %v85 = vlaneseq
    %v86 = vshrl.u32 %v85, 7
    %v87 = vsub.s32 %v84, %v86
    %v88 = vrot.slane %v60, %v87
    %v89 = vcombine.low %v67, %v81
    %v90 = vcombine.high %v67, %v81
    %v91 = vcombine.low %v74, %v88
    %v92 = vcombine.high %v74, %v88
    %v93 = vcombine.low %v42, %v44
    %v94 = vcombine.high %v42, %v44
    %v95 = vcombine.low %v46, %v48
    %v96 = vcombine.high %v46, %v48
    %v98 = vunpack.c.l.s4 1983009808
    %v99 = vunpack.c.0.s8 %v98
    %v100 = vlaneseq
    %v101 = vshrl.u32 %v100, 7
    %v102 = vsub.s32 %v99, %v101
    %v103 = vrot.slane %v93, %v102
    %v105 = vunpack.c.l.s4 1983009808
    %v106 = vunpack.c.0.s8 %v105
    %v107 = vlaneseq
    %v108 = vshrl.u32 %v107, 7
    %v109 = vsub.s32 %v106, %v108
    %v110 = vrot.slane %v94, %v109
    %v112 = vunpack.c.l.s4 1983009808
    %v113 = vunpack.c.0.s8 %v112
    %v114 = vlaneseq
    %v115 = vshrl.u32 %v114, 7
    %v116 = vsub.s32 %v113, %v115
    %v117 = vrot.slane %v95, %v116
    %v119 = vunpack.c.l.s4 1983009808
    %v120 = vunpack.c.0.s8 %v119
    %v121 = vlaneseq
    %v122 = vshrl.u32 %v121, 7
    %v123 = vsub.s32 %v120, %v122
    %v124 = vrot.slane %v96, %v123
    %v125 = vcombine.low %v103, %v117
    %v126 = vcombine.high %v103, %v117
    %v127 = vcombine.low %v110, %v124
    %v128 = vcombine.high %v110, %v124
    %v137 = vpack.c.bf16 %v89, %v89
    %v138 = vpack.c.bf16 %v90, %v90
    %v139 = vpack.c.bf16 %v91, %v91
    %v140 = vpack.c.bf16 %v92, %v92
    %v141 = vpack.c.bf16 %v125, %v125
    %v142 = vpack.c.bf16 %v126, %v126
    %v143 = vpack.c.bf16 %v127, %v127
    %v144 = vpack.c.bf16 %v128, %v128
    %v145 = vld [vmem:[#allocation3] sm:$0xf]
    %v146 = vld [vmem:[#allocation3 + $0x4] sm:$0xf]
    %v147 = vld [vmem:[#allocation3 + $0x8] sm:$0xf]
    %v148 = vld [vmem:[#allocation3 + $0xc] sm:$0xf]
    %v149 = vld [vmem:[#allocation3 + $0x10] sm:$0xf]
    %v150 = vld [vmem:[#allocation3 + $0x14] sm:$0xf]
    %v151 = vld [vmem:[#allocation3 + $0x18] sm:$0xf]
    %v152 = vld [vmem:[#allocation3 + $0x1c] sm:$0xf]
    %v153 = vld [vmem:[#allocation3 + $0x20] sm:$0xf]
    %v154 = vld [vmem:[#allocation3 + $0x24] sm:$0xf]
    %v155 = vld [vmem:[#allocation3 + $0x28] sm:$0xf]
    %v156 = vld [vmem:[#allocation3 + $0x2c] sm:$0xf]
    %v157 = vld [vmem:[#allocation3 + $0x30] sm:$0xf]
    %v158 = vld [vmem:[#allocation3 + $0x34] sm:$0xf]
    %v159 = vld [vmem:[#allocation3 + $0x38] sm:$0xf]
    %v160 = vld [vmem:[#allocation3 + $0x3c] sm:$0xf]
    %v161 = vld [vmem:[#allocation3 + $0x40] sm:$0xf]
    %v162 = vld [vmem:[#allocation3 + $0x44] sm:$0xf]
    %v163 = vld [vmem:[#allocation3 + $0x48] sm:$0xf]
    %v164 = vld [vmem:[#allocation3 + $0x4c] sm:$0xf]
    %v165 = vld [vmem:[#allocation3 + $0x50] sm:$0xf]
    %v166 = vld [vmem:[#allocation3 + $0x54] sm:$0xf]
    %v167 = vld [vmem:[#allocation3 + $0x58] sm:$0xf]
    %v168 = vld [vmem:[#allocation3 + $0x5c] sm:$0xf]
    %v169 = vld [vmem:[#allocation3 + $0x60] sm:$0xf]
    %v170 = vld [vmem:[#allocation3 + $0x64] sm:$0xf]
    %v171 = vld [vmem:[#allocation3 + $0x68] sm:$0xf]
    %v172 = vld [vmem:[#allocation3 + $0x6c] sm:$0xf]
    %v173 = vld [vmem:[#allocation3 + $0x70] sm:$0xf]
    %v174 = vld [vmem:[#allocation3 + $0x74] sm:$0xf]
    %v175 = vld [vmem:[#allocation3 + $0x78] sm:$0xf]
    %v176 = vld [vmem:[#allocation3 + $0x7c] sm:$0xf]
    %v177 = vld [vmem:[#allocation3 + $0x80] sm:$0xf]
    %v178 = vld [vmem:[#allocation3 + $0x84] sm:$0xf]
    %v179 = vld [vmem:[#allocation3 + $0x88] sm:$0xf]
    %v180 = vld [vmem:[#allocation3 + $0x8c] sm:$0xf]
    %v181 = vld [vmem:[#allocation3 + $0x90] sm:$0xf]
    %v182 = vld [vmem:[#allocation3 + $0x94] sm:$0xf]
    %v183 = vld [vmem:[#allocation3 + $0x98] sm:$0xf]
    %v184 = vld [vmem:[#allocation3 + $0x9c] sm:$0xf]
    %v185 = vld [vmem:[#allocation3 + $0xa0] sm:$0xf]
    %v186 = vld [vmem:[#allocation3 + $0xa4] sm:$0xf]
    %v187 = vld [vmem:[#allocation3 + $0xa8] sm:$0xf]
    %v188 = vld [vmem:[#allocation3 + $0xac] sm:$0xf]
    %v189 = vld [vmem:[#allocation3 + $0xb0] sm:$0xf]
    %v190 = vld [vmem:[#allocation3 + $0xb4] sm:$0xf]
    %v191 = vld [vmem:[#allocation3 + $0xb8] sm:$0xf]
    %v192 = vld [vmem:[#allocation3 + $0xbc] sm:$0xf]
    %v193 = vld [vmem:[#allocation3 + $0xc0] sm:$0xf]
    %v194 = vld [vmem:[#allocation3 + $0xc4] sm:$0xf]
    %v195 = vld [vmem:[#allocation3 + $0xc8] sm:$0xf]
    %v196 = vld [vmem:[#allocation3 + $0xcc] sm:$0xf]
    %v197 = vld [vmem:[#allocation3 + $0xd0] sm:$0xf]
    %v198 = vld [vmem:[#allocation3 + $0xd4] sm:$0xf]
    %v199 = vld [vmem:[#allocation3 + $0xd8] sm:$0xf]
    %v200 = vld [vmem:[#allocation3 + $0xdc] sm:$0xf]
    %v201 = vld [vmem:[#allocation3 + $0xe0] sm:$0xf]
    %v202 = vld [vmem:[#allocation3 + $0xe4] sm:$0xf]
    %v203 = vld [vmem:[#allocation3 + $0xe8] sm:$0xf]
    %v204 = vld [vmem:[#allocation3 + $0xec] sm:$0xf]
    %v205 = vld [vmem:[#allocation3 + $0xf0] sm:$0xf]
    %v206 = vld [vmem:[#allocation3 + $0xf4] sm:$0xf]
    %v207 = vld [vmem:[#allocation3 + $0xf8] sm:$0xf]
    %v208 = vld [vmem:[#allocation3 + $0xfc] sm:$0xf]
    %v209 = vld [vmem:[#allocation3 + $0x100] sm:$0xf]
    %v210 = vld [vmem:[#allocation3 + $0x104] sm:$0xf]
    %v211 = vld [vmem:[#allocation3 + $0x108] sm:$0xf]
    %v212 = vld [vmem:[#allocation3 + $0x10c] sm:$0xf]
    %v213 = vld [vmem:[#allocation3 + $0x110] sm:$0xf]
    %v214 = vld [vmem:[#allocation3 + $0x114] sm:$0xf]
    %v215 = vld [vmem:[#allocation3 + $0x118] sm:$0xf]
    %v216 = vld [vmem:[#allocation3 + $0x11c] sm:$0xf]
    %v217 = vld [vmem:[#allocation3 + $0x120] sm:$0xf]
    %v218 = vld [vmem:[#allocation3 + $0x124] sm:$0xf]
    %v219 = vld [vmem:[#allocation3 + $0x128] sm:$0xf]
    %v220 = vld [vmem:[#allocation3 + $0x12c] sm:$0xf]
    %v221 = vld [vmem:[#allocation3 + $0x130] sm:$0xf]
    %v222 = vld [vmem:[#allocation3 + $0x134] sm:$0xf]
    %v223 = vld [vmem:[#allocation3 + $0x138] sm:$0xf]
    %v224 = vld [vmem:[#allocation3 + $0x13c] sm:$0xf]
    %v225 = vld [vmem:[#allocation3 + $0x140] sm:$0xf]
    %v226 = vld [vmem:[#allocation3 + $0x144] sm:$0xf]
    %v227 = vld [vmem:[#allocation3 + $0x148] sm:$0xf]
    %v228 = vld [vmem:[#allocation3 + $0x14c] sm:$0xf]
    %v229 = vld [vmem:[#allocation3 + $0x150] sm:$0xf]
    %v230 = vld [vmem:[#allocation3 + $0x154] sm:$0xf]
    %v231 = vld [vmem:[#allocation3 + $0x158] sm:$0xf]
    %v232 = vld [vmem:[#allocation3 + $0x15c] sm:$0xf]
    %v233 = vld [vmem:[#allocation3 + $0x160] sm:$0xf]
    %v234 = vld [vmem:[#allocation3 + $0x164] sm:$0xf]
    %v235 = vld [vmem:[#allocation3 + $0x168] sm:$0xf]
    %v236 = vld [vmem:[#allocation3 + $0x16c] sm:$0xf]
    %v237 = vld [vmem:[#allocation3 + $0x170] sm:$0xf]
    %v238 = vld [vmem:[#allocation3 + $0x174] sm:$0xf]
    %v239 = vld [vmem:[#allocation3 + $0x178] sm:$0xf]
    %v240 = vld [vmem:[#allocation3 + $0x17c] sm:$0xf]
    %v241 = vld [vmem:[#allocation3 + $0x180] sm:$0xf]
    %v242 = vld [vmem:[#allocation3 + $0x184] sm:$0xf]
    %v243 = vld [vmem:[#allocation3 + $0x188] sm:$0xf]
    %v244 = vld [vmem:[#allocation3 + $0x18c] sm:$0xf]
    %v245 = vld [vmem:[#allocation3 + $0x190] sm:$0xf]
    %v246 = vld [vmem:[#allocation3 + $0x194] sm:$0xf]
    %v247 = vld [vmem:[#allocation3 + $0x198] sm:$0xf]
    %v248 = vld [vmem:[#allocation3 + $0x19c] sm:$0xf]
    %v249 = vld [vmem:[#allocation3 + $0x1a0] sm:$0xf]
    %v250 = vld [vmem:[#allocation3 + $0x1a4] sm:$0xf]
    %v251 = vld [vmem:[#allocation3 + $0x1a8] sm:$0xf]
    %v252 = vld [vmem:[#allocation3 + $0x1ac] sm:$0xf]
    %v253 = vld [vmem:[#allocation3 + $0x1b0] sm:$0xf]
    %v254 = vld [vmem:[#allocation3 + $0x1b4] sm:$0xf]
    %v255 = vld [vmem:[#allocation3 + $0x1b8] sm:$0xf]
    %v256 = vld [vmem:[#allocation3 + $0x1bc] sm:$0xf]
    %v257 = vld [vmem:[#allocation3 + $0x1c0] sm:$0xf]
    %v258 = vld [vmem:[#allocation3 + $0x1c4] sm:$0xf]
    %v259 = vld [vmem:[#allocation3 + $0x1c8] sm:$0xf]
    %v260 = vld [vmem:[#allocation3 + $0x1cc] sm:$0xf]
    %v261 = vld [vmem:[#allocation3 + $0x1d0] sm:$0xf]
    %v262 = vld [vmem:[#allocation3 + $0x1d4] sm:$0xf]
    %v263 = vld [vmem:[#allocation3 + $0x1d8] sm:$0xf]
    %v264 = vld [vmem:[#allocation3 + $0x1dc] sm:$0xf]
    %v265 = vld [vmem:[#allocation3 + $0x1e0] sm:$0xf]
    %v266 = vld [vmem:[#allocation3 + $0x1e4] sm:$0xf]
    %v267 = vld [vmem:[#allocation3 + $0x1e8] sm:$0xf]
    %v268 = vld [vmem:[#allocation3 + $0x1ec] sm:$0xf]
    %v269 = vld [vmem:[#allocation3 + $0x1f0] sm:$0xf]
    %v270 = vld [vmem:[#allocation3 + $0x1f4] sm:$0xf]
    %v271 = vld [vmem:[#allocation3 + $0x1f8] sm:$0xf]
    %v272 = vld [vmem:[#allocation3 + $0x1fc] sm:$0xf]
    %v401 = vunpack.c.l.b16 %v145
    %v402 = vunpack.c.l.b16 %v146
    %v403 = vunpack.c.l.b16 %v147
    %v404 = vunpack.c.l.b16 %v148
    %v405 = vunpack.c.l.b16 %v149
    %v406 = vunpack.c.l.b16 %v150
    %v407 = vunpack.c.l.b16 %v151
    %v408 = vunpack.c.l.b16 %v152
    %v409 = vunpack.c.l.b16 %v153
    %v410 = vunpack.c.l.b16 %v154
    %v411 = vunpack.c.l.b16 %v155
    %v412 = vunpack.c.l.b16 %v156
    %v413 = vunpack.c.l.b16 %v157
    %v414 = vunpack.c.l.b16 %v158
    %v415 = vunpack.c.l.b16 %v159
    %v416 = vunpack.c.l.b16 %v160
    %v417 = vunpack.c.l.b16 %v161
    %v418 = vunpack.c.l.b16 %v162
    %v419 = vunpack.c.l.b16 %v163
    %v420 = vunpack.c.l.b16 %v164
    %v421 = vunpack.c.l.b16 %v165
    %v422 = vunpack.c.l.b16 %v166
    %v423 = vunpack.c.l.b16 %v167
    %v424 = vunpack.c.l.b16 %v168
    %v425 = vunpack.c.l.b16 %v169
    %v426 = vunpack.c.l.b16 %v170
    %v427 = vunpack.c.l.b16 %v171
    %v428 = vunpack.c.l.b16 %v172
    %v429 = vunpack.c.l.b16 %v173
    %v430 = vunpack.c.l.b16 %v174
    %v431 = vunpack.c.l.b16 %v175
    %v432 = vunpack.c.l.b16 %v176
    %v433 = vunpack.c.l.b16 %v177
    %v434 = vunpack.c.l.b16 %v178
    %v435 = vunpack.c.l.b16 %v179
    %v436 = vunpack.c.l.b16 %v180
    %v437 = vunpack.c.l.b16 %v181
    %v438 = vunpack.c.l.b16 %v182
    %v439 = vunpack.c.l.b16 %v183
    %v440 = vunpack.c.l.b16 %v184
    %v441 = vunpack.c.l.b16 %v185
    %v442 = vunpack.c.l.b16 %v186
    %v443 = vunpack.c.l.b16 %v187
    %v444 = vunpack.c.l.b16 %v188
    %v445 = vunpack.c.l.b16 %v189
    %v446 = vunpack.c.l.b16 %v190
    %v447 = vunpack.c.l.b16 %v191
    %v448 = vunpack.c.l.b16 %v192
    %v449 = vunpack.c.l.b16 %v193
    %v450 = vunpack.c.l.b16 %v194
    %v451 = vunpack.c.l.b16 %v195
    %v452 = vunpack.c.l.b16 %v196
    %v453 = vunpack.c.l.b16 %v197
    %v454 = vunpack.c.l.b16 %v198
    %v455 = vunpack.c.l.b16 %v199
    %v456 = vunpack.c.l.b16 %v200
    %v457 = vunpack.c.l.b16 %v201
    %v458 = vunpack.c.l.b16 %v202
    %v459 = vunpack.c.l.b16 %v203
    %v460 = vunpack.c.l.b16 %v204
    %v461 = vunpack.c.l.b16 %v205
    %v462 = vunpack.c.l.b16 %v206
    %v463 = vunpack.c.l.b16 %v207
    %v464 = vunpack.c.l.b16 %v208
    %v465 = vunpack.c.l.b16 %v209
    %v466 = vunpack.c.l.b16 %v210
    %v467 = vunpack.c.l.b16 %v211
    %v468 = vunpack.c.l.b16 %v212
    %v469 = vunpack.c.l.b16 %v213
    %v470 = vunpack.c.l.b16 %v214
    %v471 = vunpack.c.l.b16 %v215
    %v472 = vunpack.c.l.b16 %v216
    %v473 = vunpack.c.l.b16 %v217
    %v474 = vunpack.c.l.b16 %v218
    %v475 = vunpack.c.l.b16 %v219
    %v476 = vunpack.c.l.b16 %v220
    %v477 = vunpack.c.l.b16 %v221
    %v478 = vunpack.c.l.b16 %v222
    %v479 = vunpack.c.l.b16 %v223
    %v480 = vunpack.c.l.b16 %v224
    %v481 = vunpack.c.l.b16 %v225
    %v482 = vunpack.c.l.b16 %v226
    %v483 = vunpack.c.l.b16 %v227
    %v484 = vunpack.c.l.b16 %v228
    %v485 = vunpack.c.l.b16 %v229
    %v486 = vunpack.c.l.b16 %v230
    %v487 = vunpack.c.l.b16 %v231
    %v488 = vunpack.c.l.b16 %v232
    %v489 = vunpack.c.l.b16 %v233
    %v490 = vunpack.c.l.b16 %v234
    %v491 = vunpack.c.l.b16 %v235
    %v492 = vunpack.c.l.b16 %v236
    %v493 = vunpack.c.l.b16 %v237
    %v494 = vunpack.c.l.b16 %v238
    %v495 = vunpack.c.l.b16 %v239
    %v496 = vunpack.c.l.b16 %v240
    %v497 = vunpack.c.l.b16 %v241
    %v498 = vunpack.c.l.b16 %v242
    %v499 = vunpack.c.l.b16 %v243
    %v500 = vunpack.c.l.b16 %v244
    %v501 = vunpack.c.l.b16 %v245
    %v502 = vunpack.c.l.b16 %v246
    %v503 = vunpack.c.l.b16 %v247
    %v504 = vunpack.c.l.b16 %v248
    %v505 = vunpack.c.l.b16 %v249
    %v506 = vunpack.c.l.b16 %v250
    %v507 = vunpack.c.l.b16 %v251
    %v508 = vunpack.c.l.b16 %v252
    %v509 = vunpack.c.l.b16 %v253
    %v510 = vunpack.c.l.b16 %v254
    %v511 = vunpack.c.l.b16 %v255
    %v512 = vunpack.c.l.b16 %v256
    %v513 = vunpack.c.l.b16 %v257
    %v514 = vunpack.c.l.b16 %v258
    %v515 = vunpack.c.l.b16 %v259
    %v516 = vunpack.c.l.b16 %v260
    %v517 = vunpack.c.l.b16 %v261
    %v518 = vunpack.c.l.b16 %v262
    %v519 = vunpack.c.l.b16 %v263
    %v520 = vunpack.c.l.b16 %v264
    %v521 = vunpack.c.l.b16 %v265
    %v522 = vunpack.c.l.b16 %v266
    %v523 = vunpack.c.l.b16 %v267
    %v524 = vunpack.c.l.b16 %v268
    %v525 = vunpack.c.l.b16 %v269
    %v526 = vunpack.c.l.b16 %v270
    %v527 = vunpack.c.l.b16 %v271
    %v528 = vunpack.c.l.b16 %v272
    %v529 = vpack.c.b16 %v402, %v401
    %v530 = vpack.c.b16 %v404, %v403
    %v531 = vpack.c.b16 %v406, %v405
    %v532 = vpack.c.b16 %v408, %v407
    %v533 = vpack.c.b16 %v410, %v409
    %v534 = vpack.c.b16 %v412, %v411
    %v535 = vpack.c.b16 %v414, %v413
    %v536 = vpack.c.b16 %v416, %v415
    %v537 = vpack.c.b16 %v418, %v417
    %v538 = vpack.c.b16 %v420, %v419
    %v539 = vpack.c.b16 %v422, %v421
    %v540 = vpack.c.b16 %v424, %v423
    %v541 = vpack.c.b16 %v426, %v425
    %v542 = vpack.c.b16 %v428, %v427
    %v543 = vpack.c.b16 %v430, %v429
    %v544 = vpack.c.b16 %v432, %v431
    %v545 = vpack.c.b16 %v434, %v433
    %v546 = vpack.c.b16 %v436, %v435
    %v547 = vpack.c.b16 %v438, %v437
    %v548 = vpack.c.b16 %v440, %v439
    %v549 = vpack.c.b16 %v442, %v441
    %v550 = vpack.c.b16 %v444, %v443
    %v551 = vpack.c.b16 %v446, %v445
    %v552 = vpack.c.b16 %v448, %v447
    %v553 = vpack.c.b16 %v450, %v449
    %v554 = vpack.c.b16 %v452, %v451
    %v555 = vpack.c.b16 %v454, %v453
    %v556 = vpack.c.b16 %v456, %v455
    %v557 = vpack.c.b16 %v458, %v457
    %v558 = vpack.c.b16 %v460, %v459
    %v559 = vpack.c.b16 %v462, %v461
    %v560 = vpack.c.b16 %v464, %v463
    %v561 = vpack.c.b16 %v466, %v465
    %v562 = vpack.c.b16 %v468, %v467
    %v563 = vpack.c.b16 %v470, %v469
    %v564 = vpack.c.b16 %v472, %v471
    %v565 = vpack.c.b16 %v474, %v473
    %v566 = vpack.c.b16 %v476, %v475
    %v567 = vpack.c.b16 %v478, %v477
    %v568 = vpack.c.b16 %v480, %v479
    %v569 = vpack.c.b16 %v482, %v481
    %v570 = vpack.c.b16 %v484, %v483
    %v571 = vpack.c.b16 %v486, %v485
    %v572 = vpack.c.b16 %v488, %v487
    %v573 = vpack.c.b16 %v490, %v489
    %v574 = vpack.c.b16 %v492, %v491
    %v575 = vpack.c.b16 %v494, %v493
    %v576 = vpack.c.b16 %v496, %v495
    %v577 = vpack.c.b16 %v498, %v497
    %v578 = vpack.c.b16 %v500, %v499
    %v579 = vpack.c.b16 %v502, %v501
    %v580 = vpack.c.b16 %v504, %v503
    %v581 = vpack.c.b16 %v506, %v505
    %v582 = vpack.c.b16 %v508, %v507
    %v583 = vpack.c.b16 %v510, %v509
    %v584 = vpack.c.b16 %v512, %v511
    %v585 = vpack.c.b16 %v514, %v513
    %v586 = vpack.c.b16 %v516, %v515
    %v587 = vpack.c.b16 %v518, %v517
    %v588 = vpack.c.b16 %v520, %v519
    %v589 = vpack.c.b16 %v522, %v521
    %v590 = vpack.c.b16 %v524, %v523
    %v591 = vpack.c.b16 %v526, %v525
    %v592 = vpack.c.b16 %v528, %v527
    %657 = vmatprep.subr.bf16.mxu0 0
    %658 = vmatpush1.bf16.msra.mxu0 %v529
    %659 = vmatprep.subr.bf16.mxu0 0
    %660 = vmatpush1.bf16.msra.mxu0 %v530
    %661 = vmatprep.subr.bf16.mxu0 0
    %662 = vmatpush1.bf16.msra.mxu0 %v531
    %663 = vmatprep.subr.bf16.mxu0 0
    %664 = vmatpush1.bf16.msra.mxu0 %v532
    %665 = vmatprep.subr.bf16.mxu0 0
    %666 = vmatpush1.bf16.msra.mxu0 %v533
    %667 = vmatprep.subr.bf16.mxu0 0
    %668 = vmatpush1.bf16.msra.mxu0 %v534
    %669 = vmatprep.subr.bf16.mxu0 0
    %670 = vmatpush1.bf16.msra.mxu0 %v535
    %671 = vmatprep.subr.bf16.mxu0 0
    %672 = vmatpush1.bf16.msra.mxu0 %v536
    %673 = vmatprep.subr.bf16.mxu0 0
    %674 = vmatpush1.bf16.msra.mxu0 %v537
    %675 = vmatprep.subr.bf16.mxu0 0
    %676 = vmatpush1.bf16.msra.mxu0 %v538
    %677 = vmatprep.subr.bf16.mxu0 0
    %678 = vmatpush1.bf16.msra.mxu0 %v539
    %679 = vmatprep.subr.bf16.mxu0 0
    %680 = vmatpush1.bf16.msra.mxu0 %v540
    %681 = vmatprep.subr.bf16.mxu0 0
    %682 = vmatpush1.bf16.msra.mxu0 %v541
    %683 = vmatprep.subr.bf16.mxu0 0
    %684 = vmatpush1.bf16.msra.mxu0 %v542
    %685 = vmatprep.subr.bf16.mxu0 0
    %686 = vmatpush1.bf16.msra.mxu0 %v543
    %687 = vmatprep.subr.bf16.mxu0 0
    %688 = vmatpush1.bf16.msra.mxu0 %v544
    %689 = vmatprep.mubr.bf16.mxu0 %v138
    %690 = vmatmul.mubr.bf16.gmra.mrb[0].mxu0 %v137
    %v691 = vpop.f32.mrb[0].mxu0
    %v692 = vadd.f32 0.0, %v691
    %v693 = vpop.f32.mrb[0].mxu0
    %v694 = vpop.f32.mrb[0].mxu0
    %v695 = vpop.f32.mrb[0].mxu0
    %696 = vdwg.mxu0
    %697 = vmatprep.subr.bf16.mxu0 0
    %698 = vmatpush1.bf16.msra.mxu0 %v545
    %699 = vmatprep.subr.bf16.mxu0 0
    %700 = vmatpush1.bf16.msra.mxu0 %v546
    %701 = vmatprep.subr.bf16.mxu0 0
    %702 = vmatpush1.bf16.msra.mxu0 %v547
    %703 = vmatprep.subr.bf16.mxu0 0
    %704 = vmatpush1.bf16.msra.mxu0 %v548
    %705 = vmatprep.subr.bf16.mxu0 0
    %706 = vmatpush1.bf16.msra.mxu0 %v549
    %707 = vmatprep.subr.bf16.mxu0 0
    %708 = vmatpush1.bf16.msra.mxu0 %v550
    %709 = vmatprep.subr.bf16.mxu0 0
    %710 = vmatpush1.bf16.msra.mxu0 %v551
    %711 = vmatprep.subr.bf16.mxu0 0
    %712 = vmatpush1.bf16.msra.mxu0 %v552
    %713 = vmatprep.subr.bf16.mxu0 0
    %714 = vmatpush1.bf16.msra.mxu0 %v553
    %715 = vmatprep.subr.bf16.mxu0 0
    %716 = vmatpush1.bf16.msra.mxu0 %v554
    %717 = vmatprep.subr.bf16.mxu0 0
    %718 = vmatpush1.bf16.msra.mxu0 %v555
    %719 = vmatprep.subr.bf16.mxu0 0
    %720 = vmatpush1.bf16.msra.mxu0 %v556
    %721 = vmatprep.subr.bf16.mxu0 0
    %722 = vmatpush1.bf16.msra.mxu0 %v557
    %723 = vmatprep.subr.bf16.mxu0 0
    %724 = vmatpush1.bf16.msra.mxu0 %v558
    %725 = vmatprep.subr.bf16.mxu0 0
    %726 = vmatpush1.bf16.msra.mxu0 %v559
    %727 = vmatprep.subr.bf16.mxu0 0
    %728 = vmatpush1.bf16.msra.mxu0 %v560
    %729 = vmatprep.mubr.bf16.mxu0 %v140
    %730 = vmatmul.mubr.bf16.gmra.mrb[0].mxu0 %v139
    %v731 = vpop.f32.mrb[0].mxu0
    %v732 = vadd.f32 %v692, %v731
    %v733 = vpop.f32.mrb[0].mxu0
    %v734 = vpop.f32.mrb[0].mxu0
    %v735 = vpop.f32.mrb[0].mxu0
    %736 = vdwg.mxu0
    %737 = vmatprep.subr.bf16.mxu0 0
    %738 = vmatpush1.bf16.msra.mxu0 %v561
    %739 = vmatprep.subr.bf16.mxu0 0
    %740 = vmatpush1.bf16.msra.mxu0 %v562
    %741 = vmatprep.subr.bf16.mxu0 0
    %742 = vmatpush1.bf16.msra.mxu0 %v563
    %743 = vmatprep.subr.bf16.mxu0 0
    %744 = vmatpush1.bf16.msra.mxu0 %v564
    %745 = vmatprep.subr.bf16.mxu0 0
    %746 = vmatpush1.bf16.msra.mxu0 %v565
    %747 = vmatprep.subr.bf16.mxu0 0
    %748 = vmatpush1.bf16.msra.mxu0 %v566
    %749 = vmatprep.subr.bf16.mxu0 0
    %750 = vmatpush1.bf16.msra.mxu0 %v567
    %751 = vmatprep.subr.bf16.mxu0 0
    %752 = vmatpush1.bf16.msra.mxu0 %v568
    %753 = vmatprep.subr.bf16.mxu0 0
    %754 = vmatpush1.bf16.msra.mxu0 %v569
    %755 = vmatprep.subr.bf16.mxu0 0
    %756 = vmatpush1.bf16.msra.mxu0 %v570
    %757 = vmatprep.subr.bf16.mxu0 0
    %758 = vmatpush1.bf16.msra.mxu0 %v571
    %759 = vmatprep.subr.bf16.mxu0 0
    %760 = vmatpush1.bf16.msra.mxu0 %v572
    %761 = vmatprep.subr.bf16.mxu0 0
    %762 = vmatpush1.bf16.msra.mxu0 %v573
    %763 = vmatprep.subr.bf16.mxu0 0
    %764 = vmatpush1.bf16.msra.mxu0 %v574
    %765 = vmatprep.subr.bf16.mxu0 0
    %766 = vmatpush1.bf16.msra.mxu0 %v575
    %767 = vmatprep.subr.bf16.mxu0 0
    %768 = vmatpush1.bf16.msra.mxu0 %v576
    %769 = vmatprep.mubr.bf16.mxu0 %v142
    %770 = vmatmul.mubr.bf16.gmra.mrb[0].mxu0 %v141
    %v771 = vpop.f32.mrb[0].mxu0
    %v772 = vadd.f32 %v732, %v771
    %v773 = vpop.f32.mrb[0].mxu0
    %v774 = vpop.f32.mrb[0].mxu0
    %v775 = vpop.f32.mrb[0].mxu0
    %776 = vdwg.mxu0
    %777 = vmatprep.subr.bf16.mxu0 0
    %778 = vmatpush1.bf16.msra.mxu0 %v577
    %779 = vmatprep.subr.bf16.mxu0 0
    %780 = vmatpush1.bf16.msra.mxu0 %v578
    %781 = vmatprep.subr.bf16.mxu0 0
    %782 = vmatpush1.bf16.msra.mxu0 %v579
    %783 = vmatprep.subr.bf16.mxu0 0
    %784 = vmatpush1.bf16.msra.mxu0 %v580
    %785 = vmatprep.subr.bf16.mxu0 0
    %786 = vmatpush1.bf16.msra.mxu0 %v581
    %787 = vmatprep.subr.bf16.mxu0 0
    %788 = vmatpush1.bf16.msra.mxu0 %v582
    %789 = vmatprep.subr.bf16.mxu0 0
    %790 = vmatpush1.bf16.msra.mxu0 %v583
    %791 = vmatprep.subr.bf16.mxu0 0
    %792 = vmatpush1.bf16.msra.mxu0 %v584
    %793 = vmatprep.subr.bf16.mxu0 0
    %794 = vmatpush1.bf16.msra.mxu0 %v585
    %795 = vmatprep.subr.bf16.mxu0 0
    %796 = vmatpush1.bf16.msra.mxu0 %v586
    %797 = vmatprep.subr.bf16.mxu0 0
    %798 = vmatpush1.bf16.msra.mxu0 %v587
    %799 = vmatprep.subr.bf16.mxu0 0
    %800 = vmatpush1.bf16.msra.mxu0 %v588
    %801 = vmatprep.subr.bf16.mxu0 0
    %802 = vmatpush1.bf16.msra.mxu0 %v589
    %803 = vmatprep.subr.bf16.mxu0 0
    %804 = vmatpush1.bf16.msra.mxu0 %v590
    %805 = vmatprep.subr.bf16.mxu0 0
    %806 = vmatpush1.bf16.msra.mxu0 %v591
    %807 = vmatprep.subr.bf16.mxu0 0
    %808 = vmatpush1.bf16.msra.mxu0 %v592
    %809 = vmatprep.mubr.bf16.mxu0 %v144
    %810 = vmatmul.mubr.bf16.gmra.mrb[0].mxu0 %v143
    %v811 = vpop.f32.mrb[0].mxu0
    %v812 = vadd.f32 %v772, %v811
    %v813 = vpop.f32.mrb[0].mxu0
    %v814 = vpop.f32.mrb[0].mxu0
    %v815 = vpop.f32.mrb[0].mxu0
    %816 = vdwg.mxu0
    %v817 = vadd.f32 %v40, %v812
    %818 = vst [vmem:[#allocation2] sm:$0xff] %v817
    // Predicated region
    $region30: #{_logits_impl.1} parent=1 // pred_check
      %p819 = pneg %p35
    $region31: #{_logits_impl.1} parent=1 // pred_check_branch
      %821 = sbr.rel (%p819) target = $region33
    $region32: #{_logits_impl.1} parent=1 // pred_region
      %v822 = vld [vmem:[#allocation2] sm:$0xff]
      %v823 = vld [vmem:[%s2] sm:$0x1]
      %v825 = vlaneseq
      %v826 = vshrl.u32 %v825, 7
      %v827 = vsub.s32 0, %v826
      %v828 = vrot.slane %v823, %v827
      %v830 = vadd.f32 %v822, %v828
      %v831 = vmax.f32 %v830, 0.0
      %v832 = vpack.c.bf16 %v831, %v831
      %v833 = vld [vmem:[%s3] sm:$0xf]
      %v834 = vld [vmem:[%s3 + $0x4] sm:$0xf]
      %v835 = vld [vmem:[%s3 + $0x8] sm:$0xf]
      %v836 = vld [vmem:[%s3 + $0xc] sm:$0xf]
      %v837 = vld [vmem:[%s3 + $0x10] sm:$0xf]
      %v838 = vld [vmem:[%s3 + $0x14] sm:$0xf]
      %v839 = vld [vmem:[%s3 + $0x18] sm:$0xf]
      %v840 = vld [vmem:[%s3 + $0x1c] sm:$0xf]
      %v841 = vld [vmem:[%s3 + $0x20] sm:$0xf]
      %v842 = vld [vmem:[%s3 + $0x24] sm:$0xf]
      %v843 = vld [vmem:[%s3 + $0x28] sm:$0xf]
      %v844 = vld [vmem:[%s3 + $0x2c] sm:$0xf]
      %v845 = vld [vmem:[%s3 + $0x30] sm:$0xf]
      %v846 = vld [vmem:[%s3 + $0x34] sm:$0xf]
      %v847 = vld [vmem:[%s3 + $0x38] sm:$0xf]
      %v848 = vld [vmem:[%s3 + $0x3c] sm:$0xf]
      %v849 = vld [vmem:[%s4] sm:$0x1]
      %v851 = vlaneseq
      %v852 = vshrl.u32 %v851, 7
      %v853 = vsub.s32 0, %v852
      %v854 = vrot.slane %v849, %v853
      %v872 = vunpack.c.l.b16 %v833
      %v873 = vunpack.c.l.b16 %v834
      %v874 = vunpack.c.l.b16 %v835
      %v875 = vunpack.c.l.b16 %v836
      %v876 = vunpack.c.l.b16 %v837
      %v877 = vunpack.c.l.b16 %v838
      %v878 = vunpack.c.l.b16 %v839
      %v879 = vunpack.c.l.b16 %v840
      %v880 = vunpack.c.l.b16 %v841
      %v881 = vunpack.c.l.b16 %v842
      %v882 = vunpack.c.l.b16 %v843
      %v883 = vunpack.c.l.b16 %v844
      %v884 = vunpack.c.l.b16 %v845
      %v885 = vunpack.c.l.b16 %v846
      %v886 = vunpack.c.l.b16 %v847
      %v887 = vunpack.c.l.b16 %v848
      %v888 = vpack.c.b16 %v873, %v872
      %v889 = vpack.c.b16 %v875, %v874
      %v890 = vpack.c.b16 %v877, %v876
      %v891 = vpack.c.b16 %v879, %v878
      %v892 = vpack.c.b16 %v881, %v880
      %v893 = vpack.c.b16 %v883, %v882
      %v894 = vpack.c.b16 %v885, %v884
      %v895 = vpack.c.b16 %v887, %v886
      %904 = vmatprep.subr.bf16.mxu0 0
      %905 = vmatpush1.bf16.msra.mxu0 %v888
      %906 = vmatprep.subr.bf16.mxu0 0
      %907 = vmatpush1.bf16.msra.mxu0 %v889
      %908 = vmatprep.subr.bf16.mxu0 0
      %909 = vmatpush1.bf16.msra.mxu0 %v890
      %910 = vmatprep.subr.bf16.mxu0 0
      %911 = vmatpush1.bf16.msra.mxu0 %v891
      %912 = vmatprep.subr.bf16.mxu0 0
      %913 = vmatpush1.bf16.msra.mxu0 %v892
      %914 = vmatprep.subr.bf16.mxu0 0
      %915 = vmatpush1.bf16.msra.mxu0 %v893
      %916 = vmatprep.subr.bf16.mxu0 0
      %917 = vmatpush1.bf16.msra.mxu0 %v894
      %918 = vmatprep.subr.bf16.mxu0 0
      %919 = vmatpush1.bf16.msra.mxu0 %v895
      %920 = vmatprep.subr.bf16.mxu0 0
      %921 = vmatpush1.bf16.msra.mxu0 0
      %922 = vmatprep.subr.bf16.mxu0 0
      %923 = vmatpush1.bf16.msra.mxu0 0
      %924 = vmatprep.subr.bf16.mxu0 0
      %925 = vmatpush1.bf16.msra.mxu0 0
      %926 = vmatprep.subr.bf16.mxu0 0
      %927 = vmatpush1.bf16.msra.mxu0 0
      %928 = vmatprep.subr.bf16.mxu0 0
      %929 = vmatpush1.bf16.msra.mxu0 0
      %930 = vmatprep.subr.bf16.mxu0 0
      %931 = vmatpush1.bf16.msra.mxu0 0
      %932 = vmatprep.subr.bf16.mxu0 0
      %933 = vmatpush1.bf16.msra.mxu0 0
      %934 = vmatprep.subr.bf16.mxu0 0
      %935 = vmatpush1.bf16.msra.mxu0 0
      %936 = vmatprep.mubr.bf16.mxu0 0
      %937 = vmatmul.mubr.bf16.gmra.mrb[0].mxu0 %v832
      %v938 = vpop.f32.mrb[0].mxu0
      %v939 = vadd.f32 %v854, %v938
      %v940 = vpop.f32.mrb[0].mxu0
      %v941 = vpop.f32.mrb[0].mxu0
      %v942 = vpop.f32.mrb[0].mxu0
      %943 = vdwg.mxu0
      %944 = vst [vmem:[#allocation5] sm:$0xff] %v939
    $region33: #{_logits_impl.1} parent=1 // pred_fallthru
      _
    // Predicated region
    $region34: #{_logits_impl.1} parent=1 // pred_check
      _
    $region35: #{_logits_impl.1} parent=1 // pred_check_branch
      %946 = sbr.rel (0) target = $region37
    $region36: #{_logits_impl.1} parent=1 // pred_region
      // Predicated region
      $region38: #{_logits_impl.1} parent=36 // pred_check
        _
      $region39: #{_logits_impl.1} parent=36 // pred_check_branch
        %948 = sbr.rel (0) target = $region41
      $region40: #{_logits_impl.1} parent=36 // pred_region
        // Predicated region
        $region42: #{_logits_impl.1} parent=40 // pred_check
          _
        $region43: #{_logits_impl.1} parent=40 // pred_check_branch
          %950 = sbr.rel target = $region45
        $region44: #{_logits_impl.1} parent=40 // pred_region
          // Predicated region
          $region57: #{_logits_impl.1} parent=44 // pred_check
            _
          $region58: #{_logits_impl.1} parent=44 // pred_check_branch
            %965 = sbr.rel (0) target = $region60
          $region59: #{_logits_impl.1} parent=44 // pred_region
            loop: start=0, step=1, limit=1
            $region61: #{_logits_impl.1} parent=59 // loop_pre_header
              _
            $region62: #{_logits_impl.1} parent=59 // loop_header
              %s968 = sphi 0, %s972
              %p969 = scmp.ge.s32.totalorder %s968, 1
              %s973 = sphi [#allocation5], [#allocation5]
              %s974 = sphi %s5, %s5
            $region63: #{_logits_impl.1} parent=59 // loop_header_branch
              %971 = sbr.rel (%p969) target = $region67
            $region64: #{_logits_impl.1} parent=59 // loop_body
              %v975 = vld [vmem:[%s973] sm:$0x3]
              %976 = vst [vmem:[%s974] sm:$0x3] %v975
            $region65: #{_logits_impl.1} parent=59 // loop_footer
              %s972 = sadd.s32 1, %s968
            $region66: #{_logits_impl.1} parent=59 // loop_footer_branch
              %967 = sbr.rel target = $region62
            $region67: #{_logits_impl.1} parent=59 // loop_exit
              _
          $region60: #{_logits_impl.1} parent=44 // pred_fallthru
            _
        $region45: #{_logits_impl.1} parent=40 // pred_fallthru
          _
        // Predicated region
        $region46: #{_logits_impl.1} parent=40 // pred_check
          _
        $region47: #{_logits_impl.1} parent=40 // pred_check_branch
          %952 = sbr.rel (0) target = $region49
        $region48: #{_logits_impl.1} parent=40 // pred_region
          loop: start=0, step=1, limit=1
          $region50: #{_logits_impl.1} parent=48 // loop_pre_header
            _
          $region51: #{_logits_impl.1} parent=48 // loop_header
            %s955 = sphi 0, %s959
            %p956 = scmp.ge.s32.totalorder %s955, 1
            %s960 = sphi [#allocation5], [#allocation5]
            %s961 = sphi %s5, %s5
          $region52: #{_logits_impl.1} parent=48 // loop_header_branch
            %958 = sbr.rel (%p956) target = $region56
          $region53: #{_logits_impl.1} parent=48 // loop_body
            %v962 = vld [vmem:[%s960] sm:$0x3]
            %963 = vst [vmem:[%s961] sm:$0x3] %v962
          $region54: #{_logits_impl.1} parent=48 // loop_footer
            %s959 = sadd.s32 1, %s955
          $region55: #{_logits_impl.1} parent=48 // loop_footer_branch
            %954 = sbr.rel target = $region51
          $region56: #{_logits_impl.1} parent=48 // loop_exit
            _
        $region49: #{_logits_impl.1} parent=40 // pred_fallthru
          _
      $region41: #{_logits_impl.1} parent=36 // pred_fallthru
        _
      %977 = vnop
    $region37: #{_logits_impl.1} parent=1 // pred_fallthru
      _
    // Predicated region
    $region68: #{_logits_impl.1} parent=1 // pred_check
      _
    $region69: #{_logits_impl.1} parent=1 // pred_check_branch
      %979 = sbr.rel (0) target = $region71
    $region70: #{_logits_impl.1} parent=1 // pred_region
      _
    $region71: #{_logits_impl.1} parent=1 // pred_fallthru
      _
    %980 = vsyncpa [#allocation4], 1

</llo_original>
